<compile_context>
chip_gen: v5e
topology: v5e:2x2
jax: 0.10.0
libtpu: 0.0.40
codegen_flags: <defaults>
</compile_context>

<pallas_src>
import functools

import jax
import jax.numpy as jnp
from jax.experimental import pallas as pl
from jax.experimental.pallas import tpu as pltpu


# ---------------------------------------------------------------------------
# Kernel bodies
# ---------------------------------------------------------------------------

def _mlp_math(x, w1, b1, w2, b2, w3, b3, w4, b4, m1=None, m2=None):
    """Shared 4-layer MLP math.  Weights are bf16, accumulation is f32."""
    h = jnp.dot(x.astype(jnp.bfloat16), w1,
                preferred_element_type=jnp.float32) + b1
    h = jnp.maximum(h, 0.0)
    if m1 is not None:                     # inverted-dropout mask (0 or 1/keep)
        h = h * m1

    h = jnp.dot(h.astype(jnp.bfloat16), w2,
                preferred_element_type=jnp.float32) + b2
    h = jnp.maximum(h, 0.0)
    if m2 is not None:
        h = h * m2

    h = jnp.dot(h.astype(jnp.bfloat16), w3,
                preferred_element_type=jnp.float32) + b3
    h = jnp.maximum(h, 0.0)

    return jnp.dot(h.astype(jnp.bfloat16), w4,
                   preferred_element_type=jnp.float32) + b4


def _qnet_eval_kernel(x_ref, w1_ref, b1_ref, w2_ref, b2_ref,
                      w3_ref, b3_ref, w4_ref, b4_ref, o_ref):
    out = _mlp_math(x_ref[...],
                    w1_ref[...], b1_ref[...], w2_ref[...], b2_ref[...],
                    w3_ref[...], b3_ref[...], w4_ref[...], b4_ref[...])
    o_ref[...] = out.astype(o_ref.dtype)


def _qnet_train_kernel(x_ref, w1_ref, b1_ref, w2_ref, b2_ref,
                       w3_ref, b3_ref, w4_ref, b4_ref,
                       m1_ref, m2_ref, o_ref):
    out = _mlp_math(x_ref[...],
                    w1_ref[...], b1_ref[...], w2_ref[...], b2_ref[...],
                    w3_ref[...], b3_ref[...], w4_ref[...], b4_ref[...],
                    m1_ref[...], m2_ref[...])
    o_ref[...] = out.astype(o_ref.dtype)


# ---------------------------------------------------------------------------
# Wrapper
# ---------------------------------------------------------------------------

def _round_up(v, m):
    return ((v + m - 1) // m) * m


def qnet_forward(x, params, *, dropout_rate=0.5, training=False, rng_key=None):
    """Fused QNet forward.

    x       : [B, input_size] float32
    params  : (w1, b1, w2, b2, w3, b3, w4, b4); weights are [in, out]
              (transposed from PyTorch's nn.Linear layout), biases [1, out].
    training: if True, applies inverted dropout after layers 1 and 2 using
              masks drawn from `rng_key` (PyTorch training-mode semantics);
              if False (default), dropout is the identity (eval mode).
    """
    w1, b1, w2, b2, w3, b3, w4, b4 = params
    B, in_size = x.shape
    out_size = w4.shape[1]

    # Weights -> bf16 (MXU-native, half the HBM bytes). Biases stay f32.
    w1, w2, w3, w4 = (w.astype(jnp.bfloat16) for w in (w1, w2, w3, w4))
    b1, b2, b3, b4 = (b.astype(jnp.float32) for b in (b1, b2, b3, b4))

    # Lane-dense output: zero-pad the last layer to a multiple of 128 columns.
    out_pad = _round_up(max(out_size, 128), 128)
    if out_pad != out_size:
        w4 = jnp.pad(w4, ((0, 0), (0, out_pad - out_size)))
        b4 = jnp.pad(b4, ((0, 0), (0, out_pad - out_size)))

    # Batch tiling: TB = 128 for big batches, else the (8-aligned) batch itself.
    if B >= 128:
        TB = 128
        B_pad = _round_up(B, TB)
    else:
        B_pad = _round_up(B, 8)
        TB = B_pad
    if B_pad != B:
        x = jnp.pad(x, ((0, B_pad - B), (0, 0)))
    n_blocks = B_pad // TB

    h1, h2 = w1.shape[1], w2.shape[1]      # 256, 512

    # BlockSpecs: x / out / masks move with the batch grid axis; weights and
    # biases use a constant index_map so they stay resident in VMEM.
    def _const_spec(a):
        return pl.BlockSpec(a.shape, lambda i, _n=a.ndim: (0,) * _n)

    x_spec = pl.BlockSpec((TB, in_size), lambda i: (i, 0))
    out_spec = pl.BlockSpec((TB, out_pad), lambda i: (i, 0))

    weight_ops = (w1, b1, w2, b2, w3, b3, w4, b4)
    in_specs = [x_spec] + [_const_spec(a) for a in weight_ops]
    operands = [x] + list(weight_ops)

    if training and dropout_rate > 0.0:
        if rng_key is None:
            rng_key = jax.random.PRNGKey(0)
        keep_prob = 1.0 - float(dropout_rate)
        k1, k2 = jax.random.split(rng_key)
        if keep_prob <= 0.0:               # p == 1.0 -> everything dropped
            m1 = jnp.zeros((B_pad, h1), jnp.float32)
            m2 = jnp.zeros((B_pad, h2), jnp.float32)
        else:
            scale = 1.0 / keep_prob
            m1 = jax.random.bernoulli(k1, keep_prob, (B_pad, h1)).astype(jnp.float32) * scale
            m2 = jax.random.bernoulli(k2, keep_prob, (B_pad, h2)).astype(jnp.float32) * scale
        operands += [m1, m2]
        in_specs += [pl.BlockSpec((TB, h1), lambda i: (i, 0)),
                     pl.BlockSpec((TB, h2), lambda i: (i, 0))]
        kernel = _qnet_train_kernel
    else:
        kernel = _qnet_eval_kernel

    out = pl.pallas_call(
        kernel,
        out_shape=jax.ShapeDtypeStruct((B_pad, out_pad), jnp.float32),
        grid=(n_blocks,),
        in_specs=in_specs,
        out_specs=out_spec,
        compiler_params=pltpu.CompilerParams(
            dimension_semantics=("parallel",),
            vmem_limit_bytes=32 * 1024 * 1024,
        ),
    )(*operands)

    return out[:B, :out_size]


# ---------------------------------------------------------------------------
# Params / reference
# ---------------------------------------------------------------------------

def init_qnet_params(key, input_size, output_size):
    """Mimics PyTorch nn.Linear init (uniform +-1/sqrt(fan_in)).
    Weights are returned as [in, out] bf16; biases as [1, out] f32."""
    dims = [(input_size, 256), (256, 512), (512, 256), (256, output_size)]
    params = []
    for fan_in, fan_out in dims:
        key, kw, kb = jax.random.split(key, 3)
        bound = 1.0 / (fan_in ** 0.5)
        w = jax.random.uniform(kw, (fan_in, fan_out), jnp.float32, -bound, bound)
        b = jax.random.uniform(kb, (1, fan_out), jnp.float32, -bound, bound)
        params += [w.astype(jnp.bfloat16), b]
    return tuple(params)


def qnet_reference(x, params):
    """Pure-JAX reference with the same bf16-weight / f32-accumulate math
    (eval mode: dropout = identity)."""
    w1, b1, w2, b2, w3, b3, w4, b4 = params

    def lin(h, w, b):
        return jnp.dot(h.astype(jnp.bfloat16), w.astype(jnp.bfloat16),
                       preferred_element_type=jnp.float32) + b

    h = jnp.maximum(lin(x, w1, b1), 0.0)
    h = jnp.maximum(lin(h, w2, b2), 0.0)
    h = jnp.maximum(lin(h, w3, b3), 0.0)
    return lin(h, w4, b4)


# ---------------------------------------------------------------------------
# Main
# ---------------------------------------------------------------------------

if __name__ == "__main__":
    INPUT_SIZE = 32
    OUTPUT_SIZE = 4
    BATCH = 8

    key = jax.random.PRNGKey(0)
    kx, kp, kd = jax.random.split(key, 3)
    x = jax.random.normal(kx, (BATCH, INPUT_SIZE), dtype=jnp.float32)
    params = init_qnet_params(kp, INPUT_SIZE, OUTPUT_SIZE)

    # Eval-mode forward (dropout identity, matching model.eval() in PyTorch).
    out = qnet_forward(x, params, dropout_rate=0.5, training=False)
    out = jax.block_until_ready(out)

    ref = qnet_reference(x, params)
    assert out.shape == (BATCH, OUTPUT_SIZE)
    assert jnp.allclose(out, ref, atol=1e-2, rtol=1e-2), "mismatch vs reference"

    # Exercise the training-mode dropout path once (masks via jax.random).
    out_train = qnet_forward(x, params, dropout_rate=0.5, training=True,
                             rng_key=kd)
    jax.block_until_ready(out_train)
    assert out_train.shape == (BATCH, OUTPUT_SIZE)

    print("KERNEL_OK")
</pallas_src>

<mosaic_0001>
module attributes {stable_mosaic.version = 11 : i64} {
  func.func @_qnet_eval_kernel(%arg0: i32, %arg1: memref<8x32xf32, #tpu.memory_space<vmem>>, %arg2: memref<32x256xbf16, #tpu.memory_space<vmem>>, %arg3: memref<1x256xf32, #tpu.memory_space<vmem>>, %arg4: memref<256x512xbf16, #tpu.memory_space<vmem>>, %arg5: memref<1x512xf32, #tpu.memory_space<vmem>>, %arg6: memref<512x256xbf16, #tpu.memory_space<vmem>>, %arg7: memref<1x256xf32, #tpu.memory_space<vmem>>, %arg8: memref<256x128xbf16, #tpu.memory_space<vmem>>, %arg9: memref<1x128xf32, #tpu.memory_space<vmem>>, %arg10: memref<8x128xf32, #tpu.memory_space<vmem>>) attributes {dimension_semantics = [#tpu.dimension_semantics<parallel>], iteration_bounds = array<i64: 1>, scalar_prefetch = 0 : i64, scratch_operands = 0 : i64, tpu.core_type = #tpu.core_type<tc>, window_params = [{transform_indices = @transform_0, window_bounds = array<i64: 8, 32>}, {pipeline_mode = #tpu.pipeline_mode<synchronous>, transform_indices = @transform_1, window_bounds = array<i64: 32, 256>}, {pipeline_mode = #tpu.pipeline_mode<synchronous>, transform_indices = @transform_2, window_bounds = array<i64: 1, 256>}, {pipeline_mode = #tpu.pipeline_mode<synchronous>, transform_indices = @transform_3, window_bounds = array<i64: 256, 512>}, {pipeline_mode = #tpu.pipeline_mode<synchronous>, transform_indices = @transform_4, window_bounds = array<i64: 1, 512>}, {pipeline_mode = #tpu.pipeline_mode<synchronous>, transform_indices = @transform_5, window_bounds = array<i64: 512, 256>}, {pipeline_mode = #tpu.pipeline_mode<synchronous>, transform_indices = @transform_6, window_bounds = array<i64: 1, 256>}, {pipeline_mode = #tpu.pipeline_mode<synchronous>, transform_indices = @transform_7, window_bounds = array<i64: 256, 128>}, {pipeline_mode = #tpu.pipeline_mode<synchronous>, transform_indices = @transform_8, window_bounds = array<i64: 1, 128>}, {transform_indices = @transform_9, window_bounds = array<i64: 8, 128>}]} {
    %c0 = arith.constant 0 : index
    %c0_0 = arith.constant 0 : index
    %0 = vector.load %arg1[%c0, %c0_0] : memref<8x32xf32, #tpu.memory_space<vmem>>, vector<8x32xf32>
    %c0_1 = arith.constant 0 : index
    %c0_2 = arith.constant 0 : index
    %1 = vector.load %arg2[%c0_1, %c0_2] : memref<32x256xbf16, #tpu.memory_space<vmem>>, vector<32x256xbf16>
    %c0_3 = arith.constant 0 : index
    %c0_4 = arith.constant 0 : index
    %2 = vector.load %arg3[%c0_3, %c0_4] : memref<1x256xf32, #tpu.memory_space<vmem>>, vector<1x256xf32>
    %c0_5 = arith.constant 0 : index
    %c0_6 = arith.constant 0 : index
    %3 = vector.load %arg4[%c0_5, %c0_6] : memref<256x512xbf16, #tpu.memory_space<vmem>>, vector<256x512xbf16>
    %c0_7 = arith.constant 0 : index
    %c0_8 = arith.constant 0 : index
    %4 = vector.load %arg5[%c0_7, %c0_8] : memref<1x512xf32, #tpu.memory_space<vmem>>, vector<1x512xf32>
    %c0_9 = arith.constant 0 : index
    %c0_10 = arith.constant 0 : index
    %5 = vector.load %arg6[%c0_9, %c0_10] : memref<512x256xbf16, #tpu.memory_space<vmem>>, vector<512x256xbf16>
    %c0_11 = arith.constant 0 : index
    %c0_12 = arith.constant 0 : index
    %6 = vector.load %arg7[%c0_11, %c0_12] : memref<1x256xf32, #tpu.memory_space<vmem>>, vector<1x256xf32>
    %c0_13 = arith.constant 0 : index
    %c0_14 = arith.constant 0 : index
    %7 = vector.load %arg8[%c0_13, %c0_14] : memref<256x128xbf16, #tpu.memory_space<vmem>>, vector<256x128xbf16>
    %c0_15 = arith.constant 0 : index
    %c0_16 = arith.constant 0 : index
    %8 = vector.load %arg9[%c0_15, %c0_16] : memref<1x128xf32, #tpu.memory_space<vmem>>, vector<1x128xf32>
    %9 = arith.truncf %0 : vector<8x32xf32> to vector<8x32xbf16>
    %cst = arith.constant dense<0.000000e+00> : vector<8x256xf32>
    %10 = tpu.matmul %9, %1, %cst {dimension_numbers = #tpu.dot_dimension_numbers<[1], [0], [0], [1], [0, 0, 1, 1], [], []>} : vector<8x32xbf16>, vector<32x256xbf16>, vector<8x256xf32> -> vector<8x256xf32>
    %11 = vector.broadcast %2 : vector<1x256xf32> to vector<8x256xf32>
    %12 = arith.addf %10, %11 : vector<8x256xf32>
    %cst_17 = arith.constant 0.000000e+00 : f32
    %13 = vector.broadcast %cst_17 : f32 to vector<8x256xf32>
    %14 = arith.maximumf %12, %13 : vector<8x256xf32>
    %15 = arith.truncf %14 : vector<8x256xf32> to vector<8x256xbf16>
    %cst_18 = arith.constant dense<0.000000e+00> : vector<8x512xf32>
    %16 = tpu.matmul %15, %3, %cst_18 {dimension_numbers = #tpu.dot_dimension_numbers<[1], [0], [0], [1], [0, 0, 1, 1], [], []>} : vector<8x256xbf16>, vector<256x512xbf16>, vector<8x512xf32> -> vector<8x512xf32>
    %17 = vector.broadcast %4 : vector<1x512xf32> to vector<8x512xf32>
    %18 = arith.addf %16, %17 : vector<8x512xf32>
    %cst_19 = arith.constant 0.000000e+00 : f32
    %19 = vector.broadcast %cst_19 : f32 to vector<8x512xf32>
    %20 = arith.maximumf %18, %19 : vector<8x512xf32>
    %21 = arith.truncf %20 : vector<8x512xf32> to vector<8x512xbf16>
    %cst_20 = arith.constant dense<0.000000e+00> : vector<8x256xf32>
    %22 = tpu.matmul %21, %5, %cst_20 {dimension_numbers = #tpu.dot_dimension_numbers<[1], [0], [0], [1], [0, 0, 1, 1], [], []>} : vector<8x512xbf16>, vector<512x256xbf16>, vector<8x256xf32> -> vector<8x256xf32>
    %23 = vector.broadcast %6 : vector<1x256xf32> to vector<8x256xf32>
    %24 = arith.addf %22, %23 : vector<8x256xf32>
    %cst_21 = arith.constant 0.000000e+00 : f32
    %25 = vector.broadcast %cst_21 : f32 to vector<8x256xf32>
    %26 = arith.maximumf %24, %25 : vector<8x256xf32>
    %27 = arith.truncf %26 : vector<8x256xf32> to vector<8x256xbf16>
    %cst_22 = arith.constant dense<0.000000e+00> : vector<8x128xf32>
    %28 = tpu.matmul %27, %7, %cst_22 {dimension_numbers = #tpu.dot_dimension_numbers<[1], [0], [0], [1], [0, 0, 1, 1], [], []>} : vector<8x256xbf16>, vector<256x128xbf16>, vector<8x128xf32> -> vector<8x128xf32>
    %29 = vector.broadcast %8 : vector<1x128xf32> to vector<8x128xf32>
    %30 = arith.addf %28, %29 : vector<8x128xf32>
    %c0_23 = arith.constant 0 : index
    %c0_24 = arith.constant 0 : index
    %31 = vector.load %arg10[%c0_23, %c0_24] : memref<8x128xf32, #tpu.memory_space<vmem>>, vector<8x128xf32>
    tpu.vector_store %arg10[%c0_23, %c0_24], %30 {strides = array<i32>} : memref<8x128xf32, #tpu.memory_space<vmem>>, vector<8x128xf32>,
    return
  }
  func.func @transform_0(%arg0: i32) -> (i32, i32) {
    %c0_i32 = arith.constant 0 : i32
    %c0_i32_0 = arith.constant 0 : i32
    return %arg0, %c0_i32 : i32, i32
  }
  func.func @transform_1(%arg0: i32) -> (i32, i32) {
    %c0_i32 = arith.constant 0 : i32
    %c0_i32_0 = arith.constant 0 : i32
    %c0_i32_1 = arith.constant 0 : i32
    return %c0_i32, %c0_i32_0 : i32, i32
  }
  func.func @transform_2(%arg0: i32) -> (i32, i32) {
    %c0_i32 = arith.constant 0 : i32
    %c0_i32_0 = arith.constant 0 : i32
    %c0_i32_1 = arith.constant 0 : i32
    return %c0_i32, %c0_i32_0 : i32, i32
  }
  func.func @transform_3(%arg0: i32) -> (i32, i32) {
    %c0_i32 = arith.constant 0 : i32
    %c0_i32_0 = arith.constant 0 : i32
    %c0_i32_1 = arith.constant 0 : i32
    return %c0_i32, %c0_i32_0 : i32, i32
  }
  func.func @transform_4(%arg0: i32) -> (i32, i32) {
    %c0_i32 = arith.constant 0 : i32
    %c0_i32_0 = arith.constant 0 : i32
    %c0_i32_1 = arith.constant 0 : i32
    return %c0_i32, %c0_i32_0 : i32, i32
  }
  func.func @transform_5(%arg0: i32) -> (i32, i32) {
    %c0_i32 = arith.constant 0 : i32
    %c0_i32_0 = arith.constant 0 : i32
    %c0_i32_1 = arith.constant 0 : i32
    return %c0_i32, %c0_i32_0 : i32, i32
  }
  func.func @transform_6(%arg0: i32) -> (i32, i32) {
    %c0_i32 = arith.constant 0 : i32
    %c0_i32_0 = arith.constant 0 : i32
    %c0_i32_1 = arith.constant 0 : i32
    return %c0_i32, %c0_i32_0 : i32, i32
  }
  func.func @transform_7(%arg0: i32) -> (i32, i32) {
    %c0_i32 = arith.constant 0 : i32
    %c0_i32_0 = arith.constant 0 : i32
    %c0_i32_1 = arith.constant 0 : i32
    return %c0_i32, %c0_i32_0 : i32, i32
  }
  func.func @transform_8(%arg0: i32) -> (i32, i32) {
    %c0_i32 = arith.constant 0 : i32
    %c0_i32_0 = arith.constant 0 : i32
    %c0_i32_1 = arith.constant 0 : i32
    return %c0_i32, %c0_i32_0 : i32, i32
  }
  func.func @transform_9(%arg0: i32) -> (i32, i32) {
    %c0_i32 = arith.constant 0 : i32
    %c0_i32_0 = arith.constant 0 : i32
    return %arg0, %c0_i32 : i32, i32
  }
}

</mosaic_0001>

<llo_original>
// kernel: tpu_custom_call.1
$region0: #{tpu_custom_call.1}
  #allocation0 [shape = 'u32[]', space=smem, size = 0x4, offset = 0x4, fixed_abs, tag = 'smem constant byte address 0x4 - core index']
  #allocation1 [shape = 'u32[72,128]{1,0:T(1,128)}', space=vmem, size = 0x9000, scoped, tag = 'internal scratch']
  %s0 = inlined_call_operand.hbm [shape: f32[8,32], index: 0, kind: input, shape index: {}]
  %s1 = inlined_call_operand.hbm [shape: bf16[32,256], index: 1, kind: input, shape index: {}]
  %s2 = inlined_call_operand.hbm [shape: f32[1,256], index: 2, kind: input, shape index: {}]
  %s3 = inlined_call_operand.hbm [shape: bf16[256,512], index: 3, kind: input, shape index: {}]
  %s4 = inlined_call_operand.hbm [shape: f32[1,512], index: 4, kind: input, shape index: {}]
  %s5 = inlined_call_operand.hbm [shape: bf16[512,256], index: 5, kind: input, shape index: {}]
  %s6 = inlined_call_operand.vmem [shape: f32[1,256], index: 6, kind: input, shape index: {}]
  %s7 = inlined_call_operand.hbm [shape: bf16[256,128], index: 7, kind: input, shape index: {}]
  %s8 = inlined_call_operand.vmem [shape: f32[1,128], index: 8, kind: input, shape index: {}]
  %s9 = inlined_call_operand.hbm [shape: f32[8,128], index: 9, kind: output, shape index: {}]
  %s10 = sld [smem:[#allocation0]]
  $region74: #{tpu_custom_call.1} parent=0
    _
  %s12 = ssub.s32 1, %s10
  %s13 = scalar_select 0, %s12, %s10
  $region1: #{tpu_custom_call.1} parent=0
    #allocation2 [shape = 'u8[4096]{0}', space=vmem, size = 0x1000, scoped, tag = 'input window, operand 0, single buffered']
    #allocation3 [shape = 's32[1]{0}', space=sflag, size = 0x4, scoped, tag = 'scoped memory for tpu_custom_call.1']
    #allocation4 [shape = 's32[1]{0}', space=sflag, size = 0x4, scoped, tag = 'scoped memory for tpu_custom_call.1']
    #allocation5 [shape = 'u8[16384]{0}', space=vmem, size = 0x4000, scoped, tag = 'input window, operand 1, single buffered']
    #allocation6 [shape = 's32[1]{0}', space=sflag, size = 0x4, scoped, tag = 'scoped memory for tpu_custom_call.1']
    #allocation7 [shape = 'u8[1024]{0}', space=vmem, size = 0x400, scoped, tag = 'input window, operand 2, single buffered']
    #allocation8 [shape = 'u8[262144]{0}', space=vmem, size = 0x40000, scoped, tag = 'input window, operand 3, single buffered']
    #allocation9 [shape = 's32[1]{0}', space=sflag, size = 0x4, scoped, tag = 'scoped memory for tpu_custom_call.1']
    #allocation10 [shape = 'u8[2048]{0}', space=vmem, size = 0x800, scoped, tag = 'input window, operand 4, single buffered']
    #allocation11 [shape = 'u8[262144]{0}', space=vmem, size = 0x40000, scoped, tag = 'input window, operand 5, single buffered']
    #allocation12 [shape = 's32[1]{0}', space=sflag, size = 0x4, scoped, tag = 'scoped memory for tpu_custom_call.1']
    #allocation13 [shape = 'u8[65536]{0}', space=vmem, size = 0x10000, scoped, tag = 'input window, operand 7, single buffered']
    #allocation14 [shape = 'u8[4096]{0}', space=vmem, size = 0x1000, scoped, tag = 'output window, operand 0, single buffered']
    %14 = vsyncpa [#allocation3], 0
    %15 = vsyncpa [#allocation6], 0
    %16 = vsyncpa [#allocation9], 0
    %17 = vsyncpa [#allocation12], 0
    %18 = vsyncpa [#allocation4], 0
    // Predicated region
    $region2: #{tpu_custom_call.1} parent=1 // pred_check
      _
    $region3: #{tpu_custom_call.1} parent=1 // pred_check_branch
      %20 = sbr.rel (0) target = $region5
    $region4: #{tpu_custom_call.1} parent=1 // pred_region
      %22 = vsyncadd [#allocation3], 0
      %s24 = sshll.u32 %s0, 4
      %s25 = int_to_ptr.hbm [resolvable:$true] %s24
      %s26 = sshll.u32 [#allocation2], 4
      %s27 = int_to_ptr.vmem [resolvable:$true] %s26
      %29 = dma.hbm_to_vmem [thread:$0]  %s25, 128, %s27, [#allocation3]
    $region5: #{tpu_custom_call.1} parent=1 // pred_fallthru
      _
    // Predicated region
    $region6: #{tpu_custom_call.1} parent=1 // pred_check
      _
    $region7: #{tpu_custom_call.1} parent=1 // pred_check_branch
      %31 = sbr.rel (0) target = $region9
    $region8: #{tpu_custom_call.1} parent=1 // pred_region
      %33 = vsyncadd [#allocation6], 0
      %s34 = sshll.u32 %s1, 4
      %s35 = int_to_ptr.hbm [resolvable:$true] %s34
      %s36 = sshll.u32 [#allocation5], 4
      %s37 = int_to_ptr.vmem [resolvable:$true] %s36
      %42 = dma.hbm_to_vmem [thread:$0]  %s35, 512, %s37, [#allocation6], 128, 128, 8
    $region9: #{tpu_custom_call.1} parent=1 // pred_fallthru
      _
    // Predicated region
    $region10: #{tpu_custom_call.1} parent=1 // pred_check
      _
    $region11: #{tpu_custom_call.1} parent=1 // pred_check_branch
      %44 = sbr.rel (0) target = $region13
    $region12: #{tpu_custom_call.1} parent=1 // pred_region
      %46 = vsyncadd [#allocation6], 0
      %s48 = sshll.u32 %s2, 4
      %s49 = int_to_ptr.hbm [resolvable:$true] %s48
      %s50 = sshll.u32 [#allocation7], 4
      %s51 = int_to_ptr.vmem [resolvable:$true] %s50
      %53 = dma.hbm_to_vmem [thread:$0]  %s49, 32, %s51, [#allocation6]
    $region13: #{tpu_custom_call.1} parent=1 // pred_fallthru
      _
    // Predicated region
    $region14: #{tpu_custom_call.1} parent=1 // pred_check
      _
    $region15: #{tpu_custom_call.1} parent=1 // pred_check_branch
      %55 = sbr.rel (0) target = $region17
    $region16: #{tpu_custom_call.1} parent=1 // pred_region
      %57 = vsyncadd [#allocation9], 0
      %s58 = sshll.u32 %s3, 4
      %s59 = int_to_ptr.hbm [resolvable:$true] %s58
      %s60 = sshll.u32 [#allocation8], 4
      %s61 = int_to_ptr.vmem [resolvable:$true] %s60
      %66 = dma.hbm_to_vmem [thread:$0]  %s59, 8192, %s61, [#allocation9], 256, 256, 16
    $region17: #{tpu_custom_call.1} parent=1 // pred_fallthru
      _
    // Predicated region
    $region18: #{tpu_custom_call.1} parent=1 // pred_check
      _
    $region19: #{tpu_custom_call.1} parent=1 // pred_check_branch
      %68 = sbr.rel (0) target = $region21
    $region20: #{tpu_custom_call.1} parent=1 // pred_region
      %70 = vsyncadd [#allocation9], 0
      %s72 = sshll.u32 %s4, 4
      %s73 = int_to_ptr.hbm [resolvable:$true] %s72
      %s74 = sshll.u32 [#allocation10], 4
      %s75 = int_to_ptr.vmem [resolvable:$true] %s74
      %77 = dma.hbm_to_vmem [thread:$0]  %s73, 64, %s75, [#allocation9]
    $region21: #{tpu_custom_call.1} parent=1 // pred_fallthru
      _
    // Predicated region
    $region22: #{tpu_custom_call.1} parent=1 // pred_check
      _
    $region23: #{tpu_custom_call.1} parent=1 // pred_check_branch
      %79 = sbr.rel (0) target = $region25
    $region24: #{tpu_custom_call.1} parent=1 // pred_region
      %81 = vsyncadd [#allocation12], 0
      %s82 = sshll.u32 %s5, 4
      %s83 = int_to_ptr.hbm [resolvable:$true] %s82
      %s84 = sshll.u32 [#allocation11], 4
      %s85 = int_to_ptr.vmem [resolvable:$true] %s84
      %90 = dma.hbm_to_vmem [thread:$0]  %s83, 8192, %s85, [#allocation12], 128, 128, 8
    $region25: #{tpu_custom_call.1} parent=1 // pred_fallthru
      _
    // Predicated region
    $region26: #{tpu_custom_call.1} parent=1 // pred_check
      _
    $region27: #{tpu_custom_call.1} parent=1 // pred_check_branch
      %92 = sbr.rel (0) target = $region29
    $region28: #{tpu_custom_call.1} parent=1 // pred_region
      _
    $region29: #{tpu_custom_call.1} parent=1 // pred_fallthru
      _
    // Predicated region
    $region30: #{tpu_custom_call.1} parent=1 // pred_check
      _
    $region31: #{tpu_custom_call.1} parent=1 // pred_check_branch
      %94 = sbr.rel (0) target = $region33
    $region32: #{tpu_custom_call.1} parent=1 // pred_region
      %96 = vsyncadd [#allocation12], 0
      %s97 = sshll.u32 %s7, 4
      %s98 = int_to_ptr.hbm [resolvable:$true] %s97
      %s99 = sshll.u32 [#allocation13], 4
      %s100 = int_to_ptr.vmem [resolvable:$true] %s99
      %105 = dma.hbm_to_vmem [thread:$0]  %s98, 2048, %s100, [#allocation12], 64, 64, 4
    $region33: #{tpu_custom_call.1} parent=1 // pred_fallthru
      _
    // Predicated region
    $region34: #{tpu_custom_call.1} parent=1 // pred_check
      _
    $region35: #{tpu_custom_call.1} parent=1 // pred_check_branch
      %107 = sbr.rel (0) target = $region37
    $region36: #{tpu_custom_call.1} parent=1 // pred_region
      _
    $region37: #{tpu_custom_call.1} parent=1 // pred_fallthru
      _
    // Predicated region
    $region38: #{tpu_custom_call.1} parent=1 // pred_check
      _
    $region39: #{tpu_custom_call.1} parent=1 // pred_check_branch
      %109 = sbr.rel (0) target = $region41
    $region40: #{tpu_custom_call.1} parent=1 // pred_region
      %111 = dma.done [#allocation3], 128
    $region41: #{tpu_custom_call.1} parent=1 // pred_fallthru
      _
    // Predicated region
    $region42: #{tpu_custom_call.1} parent=1 // pred_check
      _
    $region43: #{tpu_custom_call.1} parent=1 // pred_check_branch
      %113 = sbr.rel (0) target = $region45
    $region44: #{tpu_custom_call.1} parent=1 // pred_region
      %115 = dma.done [#allocation6], 512
    $region45: #{tpu_custom_call.1} parent=1 // pred_fallthru
      _
    // Predicated region
    $region46: #{tpu_custom_call.1} parent=1 // pred_check
      _
    $region47: #{tpu_custom_call.1} parent=1 // pred_check_branch
      %117 = sbr.rel (0) target = $region49
    $region48: #{tpu_custom_call.1} parent=1 // pred_region
      %119 = dma.done [#allocation6], 32
    $region49: #{tpu_custom_call.1} parent=1 // pred_fallthru
      _
    // Predicated region
    $region50: #{tpu_custom_call.1} parent=1 // pred_check
      _
    $region51: #{tpu_custom_call.1} parent=1 // pred_check_branch
      %121 = sbr.rel (0) target = $region53
    $region52: #{tpu_custom_call.1} parent=1 // pred_region
      %123 = dma.done [#allocation9], 8192
    $region53: #{tpu_custom_call.1} parent=1 // pred_fallthru
      _
    // Predicated region
    $region54: #{tpu_custom_call.1} parent=1 // pred_check
      _
    $region55: #{tpu_custom_call.1} parent=1 // pred_check_branch
      %125 = sbr.rel (0) target = $region57
    $region56: #{tpu_custom_call.1} parent=1 // pred_region
      %127 = dma.done [#allocation9], 64
    $region57: #{tpu_custom_call.1} parent=1 // pred_fallthru
      _
    // Predicated region
    $region58: #{tpu_custom_call.1} parent=1 // pred_check
      _
    $region59: #{tpu_custom_call.1} parent=1 // pred_check_branch
      %129 = sbr.rel (0) target = $region61
    $region60: #{tpu_custom_call.1} parent=1 // pred_region
      %131 = dma.done [#allocation12], 8192
    $region61: #{tpu_custom_call.1} parent=1 // pred_fallthru
      _
    // Predicated region
    $region62: #{tpu_custom_call.1} parent=1 // pred_check
      _
    $region63: #{tpu_custom_call.1} parent=1 // pred_check_branch
      %133 = sbr.rel (0) target = $region65
    $region64: #{tpu_custom_call.1} parent=1 // pred_region
      %135 = dma.done [#allocation12], 2048
    $region65: #{tpu_custom_call.1} parent=1 // pred_fallthru
      _
    %v137 = vld [vmem:[#allocation2] sm:$0xff]
    %v138 = vld [vmem:[#allocation5] sm:$0xff]
    %v139 = vld [vmem:[#allocation5 + $0x8] sm:$0xff]
    %v140 = vld [vmem:[#allocation5 + $0x10] sm:$0xff]
    %v141 = vld [vmem:[#allocation5 + $0x18] sm:$0xff]
    %v142 = vld [vmem:[#allocation7] sm:$0x3]
    %v143 = vld [vmem:[#allocation8] sm:$0xff]
    %v144 = vld [vmem:[#allocation8 + $0x8] sm:$0xff]
    %v145 = vld [vmem:[#allocation8 + $0x10] sm:$0xff]
    %v146 = vld [vmem:[#allocation8 + $0x18] sm:$0xff]
    %v147 = vld [vmem:[#allocation8 + $0x20] sm:$0xff]
    %v148 = vld [vmem:[#allocation8 + $0x28] sm:$0xff]
    %v149 = vld [vmem:[#allocation8 + $0x30] sm:$0xff]
    %v150 = vld [vmem:[#allocation8 + $0x38] sm:$0xff]
    %v151 = vld [vmem:[#allocation8 + $0x40] sm:$0xff]
    %v152 = vld [vmem:[#allocation8 + $0x48] sm:$0xff]
    %v153 = vld [vmem:[#allocation8 + $0x50] sm:$0xff]
    %v154 = vld [vmem:[#allocation8 + $0x58] sm:$0xff]
    %v155 = vld [vmem:[#allocation8 + $0x60] sm:$0xff]
    %v156 = vld [vmem:[#allocation8 + $0x68] sm:$0xff]
    %v157 = vld [vmem:[#allocation8 + $0x70] sm:$0xff]
    %v158 = vld [vmem:[#allocation8 + $0x78] sm:$0xff]
    %v159 = vld [vmem:[#allocation8 + $0x80] sm:$0xff]
    %v160 = vld [vmem:[#allocation8 + $0x88] sm:$0xff]
    %v161 = vld [vmem:[#allocation8 + $0x90] sm:$0xff]
    %v162 = vld [vmem:[#allocation8 + $0x98] sm:$0xff]
    %v163 = vld [vmem:[#allocation8 + $0xa0] sm:$0xff]
    %v164 = vld [vmem:[#allocation8 + $0xa8] sm:$0xff]
    %v165 = vld [vmem:[#allocation8 + $0xb0] sm:$0xff]
    %v166 = vld [vmem:[#allocation8 + $0xb8] sm:$0xff]
    %v167 = vld [vmem:[#allocation8 + $0xc0] sm:$0xff]
    %v168 = vld [vmem:[#allocation8 + $0xc8] sm:$0xff]
    %v169 = vld [vmem:[#allocation8 + $0xd0] sm:$0xff]
    %v170 = vld [vmem:[#allocation8 + $0xd8] sm:$0xff]
    %v171 = vld [vmem:[#allocation8 + $0xe0] sm:$0xff]
    %v172 = vld [vmem:[#allocation8 + $0xe8] sm:$0xff]
    %v173 = vld [vmem:[#allocation8 + $0xf0] sm:$0xff]
    %v174 = vld [vmem:[#allocation8 + $0xf8] sm:$0xff]
    %v175 = vld [vmem:[#allocation8 + $0x100] sm:$0xff]
    %v176 = vld [vmem:[#allocation8 + $0x108] sm:$0xff]
    %v177 = vld [vmem:[#allocation8 + $0x110] sm:$0xff]
    %v178 = vld [vmem:[#allocation8 + $0x118] sm:$0xff]
    %v179 = vld [vmem:[#allocation8 + $0x120] sm:$0xff]
    %v180 = vld [vmem:[#allocation8 + $0x128] sm:$0xff]
    %v181 = vld [vmem:[#allocation8 + $0x130] sm:$0xff]
    %v182 = vld [vmem:[#allocation8 + $0x138] sm:$0xff]
    %v183 = vld [vmem:[#allocation8 + $0x140] sm:$0xff]
    %v184 = vld [vmem:[#allocation8 + $0x148] sm:$0xff]
    %v185 = vld [vmem:[#allocation8 + $0x150] sm:$0xff]
    %v186 = vld [vmem:[#allocation8 + $0x158] sm:$0xff]
    %v187 = vld [vmem:[#allocation8 + $0x160] sm:$0xff]
    %v188 = vld [vmem:[#allocation8 + $0x168] sm:$0xff]
    %v189 = vld [vmem:[#allocation8 + $0x170] sm:$0xff]
    %v190 = vld [vmem:[#allocation8 + $0x178] sm:$0xff]
    %v191 = vld [vmem:[#allocation8 + $0x180] sm:$0xff]
    %v192 = vld [vmem:[#allocation8 + $0x188] sm:$0xff]
    %v193 = vld [vmem:[#allocation8 + $0x190] sm:$0xff]
    %v194 = vld [vmem:[#allocation8 + $0x198] sm:$0xff]
    %v195 = vld [vmem:[#allocation8 + $0x1a0] sm:$0xff]
    %v196 = vld [vmem:[#allocation8 + $0x1a8] sm:$0xff]
    %v197 = vld [vmem:[#allocation8 + $0x1b0] sm:$0xff]
    %v198 = vld [vmem:[#allocation8 + $0x1b8] sm:$0xff]
    %v199 = vld [vmem:[#allocation8 + $0x1c0] sm:$0xff]
    %v200 = vld [vmem:[#allocation8 + $0x1c8] sm:$0xff]
    %v201 = vld [vmem:[#allocation8 + $0x1d0] sm:$0xff]
    %v202 = vld [vmem:[#allocation8 + $0x1d8] sm:$0xff]
    %v203 = vld [vmem:[#allocation8 + $0x1e0] sm:$0xff]
    %v204 = vld [vmem:[#allocation8 + $0x1e8] sm:$0xff]
    %v205 = vld [vmem:[#allocation8 + $0x1f0] sm:$0xff]
    %v206 = vld [vmem:[#allocation8 + $0x1f8] sm:$0xff]
    %v207 = vld [vmem:[#allocation10] sm:$0xf]
    %v208 = vld [vmem:[#allocation11] sm:$0xff]
    %v209 = vld [vmem:[#allocation11 + $0x8] sm:$0xff]
    %v210 = vld [vmem:[#allocation11 + $0x10] sm:$0xff]
    %v211 = vld [vmem:[#allocation11 + $0x18] sm:$0xff]
    %v212 = vld [vmem:[#allocation11 + $0x20] sm:$0xff]
    %v213 = vld [vmem:[#allocation11 + $0x28] sm:$0xff]
    %v214 = vld [vmem:[#allocation11 + $0x30] sm:$0xff]
    %v215 = vld [vmem:[#allocation11 + $0x38] sm:$0xff]
    %v216 = vld [vmem:[#allocation11 + $0x40] sm:$0xff]
    %v217 = vld [vmem:[#allocation11 + $0x48] sm:$0xff]
    %v218 = vld [vmem:[#allocation11 + $0x50] sm:$0xff]
    %v219 = vld [vmem:[#allocation11 + $0x58] sm:$0xff]
    %v220 = vld [vmem:[#allocation11 + $0x60] sm:$0xff]
    %v221 = vld [vmem:[#allocation11 + $0x68] sm:$0xff]
    %v222 = vld [vmem:[#allocation11 + $0x70] sm:$0xff]
    %v223 = vld [vmem:[#allocation11 + $0x78] sm:$0xff]
    %v224 = vld [vmem:[#allocation11 + $0x80] sm:$0xff]
    %v225 = vld [vmem:[#allocation11 + $0x88] sm:$0xff]
    %v226 = vld [vmem:[#allocation11 + $0x90] sm:$0xff]
    %v227 = vld [vmem:[#allocation11 + $0x98] sm:$0xff]
    %v228 = vld [vmem:[#allocation11 + $0xa0] sm:$0xff]
    %v229 = vld [vmem:[#allocation11 + $0xa8] sm:$0xff]
    %v230 = vld [vmem:[#allocation11 + $0xb0] sm:$0xff]
    %v231 = vld [vmem:[#allocation11 + $0xb8] sm:$0xff]
    %v232 = vld [vmem:[#allocation11 + $0xc0] sm:$0xff]
    %v233 = vld [vmem:[#allocation11 + $0xc8] sm:$0xff]
    %v234 = vld [vmem:[#allocation11 + $0xd0] sm:$0xff]
    %v235 = vld [vmem:[#allocation11 + $0xd8] sm:$0xff]
    %v236 = vld [vmem:[#allocation11 + $0xe0] sm:$0xff]
    %v237 = vld [vmem:[#allocation11 + $0xe8] sm:$0xff]
    %v238 = vld [vmem:[#allocation11 + $0xf0] sm:$0xff]
    %v239 = vld [vmem:[#allocation11 + $0xf8] sm:$0xff]
    %v240 = vld [vmem:[#allocation11 + $0x100] sm:$0xff]
    %v241 = vld [vmem:[#allocation11 + $0x108] sm:$0xff]
    %v242 = vld [vmem:[#allocation11 + $0x110] sm:$0xff]
    %v243 = vld [vmem:[#allocation11 + $0x118] sm:$0xff]
    %v244 = vld [vmem:[#allocation11 + $0x120] sm:$0xff]
    %v245 = vld [vmem:[#allocation11 + $0x128] sm:$0xff]
    %v246 = vld [vmem:[#allocation11 + $0x130] sm:$0xff]
    %v247 = vld [vmem:[#allocation11 + $0x138] sm:$0xff]
    %v248 = vld [vmem:[#allocation11 + $0x140] sm:$0xff]
    %v249 = vld [vmem:[#allocation11 + $0x148] sm:$0xff]
    %v250 = vld [vmem:[#allocation11 + $0x150] sm:$0xff]
    %v251 = vld [vmem:[#allocation11 + $0x158] sm:$0xff]
    %v252 = vld [vmem:[#allocation11 + $0x160] sm:$0xff]
    %v253 = vld [vmem:[#allocation11 + $0x168] sm:$0xff]
    %v254 = vld [vmem:[#allocation11 + $0x170] sm:$0xff]
    %v255 = vld [vmem:[#allocation11 + $0x178] sm:$0xff]
    %v256 = vld [vmem:[#allocation11 + $0x180] sm:$0xff]
    %v257 = vld [vmem:[#allocation11 + $0x188] sm:$0xff]
    %v258 = vld [vmem:[#allocation11 + $0x190] sm:$0xff]
    %v259 = vld [vmem:[#allocation11 + $0x198] sm:$0xff]
    %v260 = vld [vmem:[#allocation11 + $0x1a0] sm:$0xff]
    %v261 = vld [vmem:[#allocation11 + $0x1a8] sm:$0xff]
    %v262 = vld [vmem:[#allocation11 + $0x1b0] sm:$0xff]
    %v263 = vld [vmem:[#allocation11 + $0x1b8] sm:$0xff]
    %v264 = vld [vmem:[#allocation11 + $0x1c0] sm:$0xff]
    %v265 = vld [vmem:[#allocation11 + $0x1c8] sm:$0xff]
    %v266 = vld [vmem:[#allocation11 + $0x1d0] sm:$0xff]
    %v267 = vld [vmem:[#allocation11 + $0x1d8] sm:$0xff]
    %v268 = vld [vmem:[#allocation11 + $0x1e0] sm:$0xff]
    %v269 = vld [vmem:[#allocation11 + $0x1e8] sm:$0xff]
    %v270 = vld [vmem:[#allocation11 + $0x1f0] sm:$0xff]
    %v271 = vld [vmem:[#allocation11 + $0x1f8] sm:$0xff]
    %v272 = vld [vmem:[%s6] sm:$0x3]
    %v273 = vld [vmem:[#allocation13] sm:$0xf]
    %v274 = vld [vmem:[#allocation13 + $0x4] sm:$0xf]
    %v275 = vld [vmem:[#allocation13 + $0x8] sm:$0xf]
    %v276 = vld [vmem:[#allocation13 + $0xc] sm:$0xf]
    %v277 = vld [vmem:[#allocation13 + $0x10] sm:$0xf]
    %v278 = vld [vmem:[#allocation13 + $0x14] sm:$0xf]
    %v279 = vld [vmem:[#allocation13 + $0x18] sm:$0xf]
    %v280 = vld [vmem:[#allocation13 + $0x1c] sm:$0xf]
    %v281 = vld [vmem:[#allocation13 + $0x20] sm:$0xf]
    %v282 = vld [vmem:[#allocation13 + $0x24] sm:$0xf]
    %v283 = vld [vmem:[#allocation13 + $0x28] sm:$0xf]
    %v284 = vld [vmem:[#allocation13 + $0x2c] sm:$0xf]
    %v285 = vld [vmem:[#allocation13 + $0x30] sm:$0xf]
    %v286 = vld [vmem:[#allocation13 + $0x34] sm:$0xf]
    %v287 = vld [vmem:[#allocation13 + $0x38] sm:$0xf]
    %v288 = vld [vmem:[#allocation13 + $0x3c] sm:$0xf]
    %v289 = vld [vmem:[#allocation13 + $0x40] sm:$0xf]
    %v290 = vld [vmem:[#allocation13 + $0x44] sm:$0xf]
    %v291 = vld [vmem:[#allocation13 + $0x48] sm:$0xf]
    %v292 = vld [vmem:[#allocation13 + $0x4c] sm:$0xf]
    %v293 = vld [vmem:[#allocation13 + $0x50] sm:$0xf]
    %v294 = vld [vmem:[#allocation13 + $0x54] sm:$0xf]
    %v295 = vld [vmem:[#allocation13 + $0x58] sm:$0xf]
    %v296 = vld [vmem:[#allocation13 + $0x5c] sm:$0xf]
    %v297 = vld [vmem:[#allocation13 + $0x60] sm:$0xf]
    %v298 = vld [vmem:[#allocation13 + $0x64] sm:$0xf]
    %v299 = vld [vmem:[#allocation13 + $0x68] sm:$0xf]
    %v300 = vld [vmem:[#allocation13 + $0x6c] sm:$0xf]
    %v301 = vld [vmem:[#allocation13 + $0x70] sm:$0xf]
    %v302 = vld [vmem:[#allocation13 + $0x74] sm:$0xf]
    %v303 = vld [vmem:[#allocation13 + $0x78] sm:$0xf]
    %v304 = vld [vmem:[#allocation13 + $0x7c] sm:$0xf]
    %v305 = vld [vmem:[%s8] sm:$0x1]
    %v306 = vpack.c.bf16 %v137, %v137
    %v308 = vperm.slane %v142, 0
    %v309 = vperm.slane %v142, 1
    %v316 = vunpack.c.l.b16 %v138
    %v317 = vunpack.c.h.b16 %v138
    %v318 = vunpack.c.l.b16 %v139
    %v319 = vunpack.c.h.b16 %v139
    %v320 = vunpack.c.l.b16 %v140
    %v321 = vunpack.c.h.b16 %v140
    %v322 = vunpack.c.l.b16 %v141
    %v323 = vunpack.c.h.b16 %v141
    %v324 = vpack.c.b16 %v318, %v316
    %v325 = vpack.c.b16 %v319, %v317
    %v326 = vpack.c.b16 %v322, %v320
    %v327 = vpack.c.b16 %v323, %v321
    %vm332 = vcmask 261120
    %v334 = vsel %vm332, %v306, 0
    %336 = vmatpush.bf16.msra.mxu0 0
    %337 = vmatpush.bf16.msra.mxu0 0
    %338 = vmatpush.bf16.msra.mxu0 0
    %339 = vmatpush.bf16.msra.mxu0 0
    %340 = vmatpush.bf16.msra.mxu0 0
    %341 = vmatpush.bf16.msra.mxu0 0
    %342 = vmatpush.bf16.msra.mxu0 %v326
    %343 = vmatpush.bf16.msra.mxu0 %v324
    %344 = vmatmul.bf16.gmra.mxu0 %v334
    %v345 = vpop.f32.mrf.mxu0
    %v346 = vadd.f32 %v308, %v345
    %v347 = vpop.f32.mrf.mxu0
    %348 = vdwg.mxu0
    %349 = vmatpush.bf16.msra.mxu0 0
    %350 = vmatpush.bf16.msra.mxu0 0
    %351 = vmatpush.bf16.msra.mxu0 0
    %352 = vmatpush.bf16.msra.mxu0 0
    %353 = vmatpush.bf16.msra.mxu0 0
    %354 = vmatpush.bf16.msra.mxu0 0
    %355 = vmatpush.bf16.msra.mxu0 %v327
    %356 = vmatpush.bf16.msra.mxu0 %v325
    %357 = vmatmul.bf16.gmra.mxu0 %v334
    %v358 = vpop.f32.mrf.mxu0
    %v359 = vadd.f32 %v309, %v358
    %v360 = vpop.f32.mrf.mxu0
    %361 = vdwg.mxu0
    %v362 = vmax.f32 %v346, 0.0
    %v363 = vmax.f32 %v359, 0.0
    %v364 = vpack.c.bf16 %v362, %v362
    %v365 = vpack.c.bf16 %v363, %v363
    %v367 = vperm.slane %v207, 0
    %v368 = vperm.slane %v207, 1
    %v369 = vperm.slane %v207, 2
    %v370 = vperm.slane %v207, 3
    %v439 = vunpack.c.l.b16 %v143
    %v440 = vunpack.c.h.b16 %v143
    %v441 = vunpack.c.l.b16 %v144
    %v442 = vunpack.c.h.b16 %v144
    %v443 = vunpack.c.l.b16 %v145
    %v444 = vunpack.c.h.b16 %v145
    %v445 = vunpack.c.l.b16 %v146
    %v446 = vunpack.c.h.b16 %v146
    %v447 = vunpack.c.l.b16 %v147
    %v448 = vunpack.c.h.b16 %v147
    %v449 = vunpack.c.l.b16 %v148
    %v450 = vunpack.c.h.b16 %v148
    %v451 = vunpack.c.l.b16 %v149
    %v452 = vunpack.c.h.b16 %v149
    %v453 = vunpack.c.l.b16 %v150
    %v454 = vunpack.c.h.b16 %v150
    %v455 = vunpack.c.l.b16 %v151
    %v456 = vunpack.c.h.b16 %v151
    %v457 = vunpack.c.l.b16 %v152
    %v458 = vunpack.c.h.b16 %v152
    %v459 = vunpack.c.l.b16 %v153
    %v460 = vunpack.c.h.b16 %v153
    %v461 = vunpack.c.l.b16 %v154
    %v462 = vunpack.c.h.b16 %v154
    %v463 = vunpack.c.l.b16 %v155
    %v464 = vunpack.c.h.b16 %v155
    %v465 = vunpack.c.l.b16 %v156
    %v466 = vunpack.c.h.b16 %v156
    %v467 = vunpack.c.l.b16 %v157
    %v468 = vunpack.c.h.b16 %v157
    %v469 = vunpack.c.l.b16 %v158
    %v470 = vunpack.c.h.b16 %v158
    %v471 = vunpack.c.l.b16 %v159
    %v472 = vunpack.c.h.b16 %v159
    %v473 = vunpack.c.l.b16 %v160
    %v474 = vunpack.c.h.b16 %v160
    %v475 = vunpack.c.l.b16 %v161
    %v476 = vunpack.c.h.b16 %v161
    %v477 = vunpack.c.l.b16 %v162
    %v478 = vunpack.c.h.b16 %v162
    %v479 = vunpack.c.l.b16 %v163
    %v480 = vunpack.c.h.b16 %v163
    %v481 = vunpack.c.l.b16 %v164
    %v482 = vunpack.c.h.b16 %v164
    %v483 = vunpack.c.l.b16 %v165
    %v484 = vunpack.c.h.b16 %v165
    %v485 = vunpack.c.l.b16 %v166
    %v486 = vunpack.c.h.b16 %v166
    %v487 = vunpack.c.l.b16 %v167
    %v488 = vunpack.c.h.b16 %v167
    %v489 = vunpack.c.l.b16 %v168
    %v490 = vunpack.c.h.b16 %v168
    %v491 = vunpack.c.l.b16 %v169
    %v492 = vunpack.c.h.b16 %v169
    %v493 = vunpack.c.l.b16 %v170
    %v494 = vunpack.c.h.b16 %v170
    %v495 = vunpack.c.l.b16 %v171
    %v496 = vunpack.c.h.b16 %v171
    %v497 = vunpack.c.l.b16 %v172
    %v498 = vunpack.c.h.b16 %v172
    %v499 = vunpack.c.l.b16 %v173
    %v500 = vunpack.c.h.b16 %v173
    %v501 = vunpack.c.l.b16 %v174
    %v502 = vunpack.c.h.b16 %v174
    %v503 = vunpack.c.l.b16 %v175
    %v504 = vunpack.c.h.b16 %v175
    %v505 = vunpack.c.l.b16 %v176
    %v506 = vunpack.c.h.b16 %v176
    %v507 = vunpack.c.l.b16 %v177
    %v508 = vunpack.c.h.b16 %v177
    %v509 = vunpack.c.l.b16 %v178
    %v510 = vunpack.c.h.b16 %v178
    %v511 = vunpack.c.l.b16 %v179
    %v512 = vunpack.c.h.b16 %v179
    %v513 = vunpack.c.l.b16 %v180
    %v514 = vunpack.c.h.b16 %v180
    %v515 = vunpack.c.l.b16 %v181
    %v516 = vunpack.c.h.b16 %v181
    %v517 = vunpack.c.l.b16 %v182
    %v518 = vunpack.c.h.b16 %v182
    %v519 = vunpack.c.l.b16 %v183
    %v520 = vunpack.c.h.b16 %v183
    %v521 = vunpack.c.l.b16 %v184
    %v522 = vunpack.c.h.b16 %v184
    %v523 = vunpack.c.l.b16 %v185
    %v524 = vunpack.c.h.b16 %v185
    %v525 = vunpack.c.l.b16 %v186
    %v526 = vunpack.c.h.b16 %v186
    %v527 = vunpack.c.l.b16 %v187
    %v528 = vunpack.c.h.b16 %v187
    %v529 = vunpack.c.l.b16 %v188
    %v530 = vunpack.c.h.b16 %v188
    %v531 = vunpack.c.l.b16 %v189
    %v532 = vunpack.c.h.b16 %v189
    %v533 = vunpack.c.l.b16 %v190
    %v534 = vunpack.c.h.b16 %v190
    %v535 = vunpack.c.l.b16 %v191
    %v536 = vunpack.c.h.b16 %v191
    %v537 = vunpack.c.l.b16 %v192
    %v538 = vunpack.c.h.b16 %v192
    %v539 = vunpack.c.l.b16 %v193
    %v540 = vunpack.c.h.b16 %v193
    %v541 = vunpack.c.l.b16 %v194
    %v542 = vunpack.c.h.b16 %v194
    %v543 = vunpack.c.l.b16 %v195
    %v544 = vunpack.c.h.b16 %v195
    %v545 = vunpack.c.l.b16 %v196
    %v546 = vunpack.c.h.b16 %v196
    %v547 = vunpack.c.l.b16 %v197
    %v548 = vunpack.c.h.b16 %v197
    %v549 = vunpack.c.l.b16 %v198
    %v550 = vunpack.c.h.b16 %v198
    %v551 = vunpack.c.l.b16 %v199
    %v552 = vunpack.c.h.b16 %v199
    %v553 = vunpack.c.l.b16 %v200
    %v554 = vunpack.c.h.b16 %v200
    %v555 = vunpack.c.l.b16 %v201
    %v556 = vunpack.c.h.b16 %v201
    %v557 = vunpack.c.l.b16 %v202
    %v558 = vunpack.c.h.b16 %v202
    %v559 = vunpack.c.l.b16 %v203
    %v560 = vunpack.c.h.b16 %v203
    %v561 = vunpack.c.l.b16 %v204
    %v562 = vunpack.c.h.b16 %v204
    %v563 = vunpack.c.l.b16 %v205
    %v564 = vunpack.c.h.b16 %v205
    %v565 = vunpack.c.l.b16 %v206
    %v566 = vunpack.c.h.b16 %v206
    %v567 = vpack.c.b16 %v443, %v439
    %v568 = vpack.c.b16 %v444, %v440
    %v569 = vpack.c.b16 %v445, %v441
    %v570 = vpack.c.b16 %v446, %v442
    %v571 = vpack.c.b16 %v451, %v447
    %v572 = vpack.c.b16 %v452, %v448
    %v573 = vpack.c.b16 %v453, %v449
    %v574 = vpack.c.b16 %v454, %v450
    %v575 = vpack.c.b16 %v459, %v455
    %v576 = vpack.c.b16 %v460, %v456
    %v577 = vpack.c.b16 %v461, %v457
    %v578 = vpack.c.b16 %v462, %v458
    %v579 = vpack.c.b16 %v467, %v463
    %v580 = vpack.c.b16 %v468, %v464
    %v581 = vpack.c.b16 %v469, %v465
    %v582 = vpack.c.b16 %v470, %v466
    %v583 = vpack.c.b16 %v475, %v471
    %v584 = vpack.c.b16 %v476, %v472
    %v585 = vpack.c.b16 %v477, %v473
    %v586 = vpack.c.b16 %v478, %v474
    %v587 = vpack.c.b16 %v483, %v479
    %v588 = vpack.c.b16 %v484, %v480
    %v589 = vpack.c.b16 %v485, %v481
    %v590 = vpack.c.b16 %v486, %v482
    %v591 = vpack.c.b16 %v491, %v487
    %v592 = vpack.c.b16 %v492, %v488
    %v593 = vpack.c.b16 %v493, %v489
    %v594 = vpack.c.b16 %v494, %v490
    %v595 = vpack.c.b16 %v499, %v495
    %v596 = vpack.c.b16 %v500, %v496
    %v597 = vpack.c.b16 %v501, %v497
    %v598 = vpack.c.b16 %v502, %v498
    %v599 = vpack.c.b16 %v507, %v503
    %v600 = vpack.c.b16 %v508, %v504
    %v601 = vpack.c.b16 %v509, %v505
    %v602 = vpack.c.b16 %v510, %v506
    %v603 = vpack.c.b16 %v515, %v511
    %v604 = vpack.c.b16 %v516, %v512
    %v605 = vpack.c.b16 %v517, %v513
    %v606 = vpack.c.b16 %v518, %v514
    %v607 = vpack.c.b16 %v523, %v519
    %v608 = vpack.c.b16 %v524, %v520
    %v609 = vpack.c.b16 %v525, %v521
    %v610 = vpack.c.b16 %v526, %v522
    %v611 = vpack.c.b16 %v531, %v527
    %v612 = vpack.c.b16 %v532, %v528
    %v613 = vpack.c.b16 %v533, %v529
    %v614 = vpack.c.b16 %v534, %v530
    %v615 = vpack.c.b16 %v539, %v535
    %v616 = vpack.c.b16 %v540, %v536
    %v617 = vpack.c.b16 %v541, %v537
    %v618 = vpack.c.b16 %v542, %v538
    %v619 = vpack.c.b16 %v547, %v543
    %v620 = vpack.c.b16 %v548, %v544
    %v621 = vpack.c.b16 %v549, %v545
    %v622 = vpack.c.b16 %v550, %v546
    %v623 = vpack.c.b16 %v555, %v551
    %v624 = vpack.c.b16 %v556, %v552
    %v625 = vpack.c.b16 %v557, %v553
    %v626 = vpack.c.b16 %v558, %v554
    %v627 = vpack.c.b16 %v563, %v559
    %v628 = vpack.c.b16 %v564, %v560
    %v629 = vpack.c.b16 %v565, %v561
    %v630 = vpack.c.b16 %v566, %v562
    %695 = vmatpush.bf16.msra.mxu0 %v595
    %696 = vmatpush.bf16.msra.mxu0 %v591
    %697 = vmatpush.bf16.msra.mxu0 %v587
    %698 = vmatpush.bf16.msra.mxu0 %v583
    %699 = vmatpush.bf16.msra.mxu0 %v579
    %700 = vmatpush.bf16.msra.mxu0 %v575
    %701 = vmatpush.bf16.msra.mxu0 %v571
    %702 = vmatpush.bf16.msra.mxu0 %v567
    %703 = vmatmul.bf16.gmra.mxu0 %v364
    %v704 = vpop.f32.mrf.mxu0
    %v705 = vadd.f32 %v367, %v704
    %v706 = vpop.f32.mrf.mxu0
    %707 = vdwg.mxu0
    %708 = vmatpush.bf16.msra.mxu0 %v627
    %709 = vmatpush.bf16.msra.mxu0 %v623
    %710 = vmatpush.bf16.msra.mxu0 %v619
    %711 = vmatpush.bf16.msra.mxu0 %v615
    %712 = vmatpush.bf16.msra.mxu0 %v611
    %713 = vmatpush.bf16.msra.mxu0 %v607
    %714 = vmatpush.bf16.msra.mxu0 %v603
    %715 = vmatpush.bf16.msra.mxu0 %v599
    %716 = vmatmul.bf16.gmra.mxu0 %v365
    %v717 = vpop.f32.mrf.mxu0
    %v718 = vadd.f32 %v705, %v717
    %v719 = vpop.f32.mrf.mxu0
    %720 = vdwg.mxu0
    %721 = vmatpush.bf16.msra.mxu0 %v596
    %722 = vmatpush.bf16.msra.mxu0 %v592
    %723 = vmatpush.bf16.msra.mxu0 %v588
    %724 = vmatpush.bf16.msra.mxu0 %v584
    %725 = vmatpush.bf16.msra.mxu0 %v580
    %726 = vmatpush.bf16.msra.mxu0 %v576
    %727 = vmatpush.bf16.msra.mxu0 %v572
    %728 = vmatpush.bf16.msra.mxu0 %v568
    %729 = vmatmul.bf16.gmra.mxu0 %v364
    %v730 = vpop.f32.mrf.mxu0
    %v731 = vadd.f32 %v368, %v730
    %v732 = vpop.f32.mrf.mxu0
    %733 = vdwg.mxu0
    %734 = vmatpush.bf16.msra.mxu0 %v628
    %735 = vmatpush.bf16.msra.mxu0 %v624
    %736 = vmatpush.bf16.msra.mxu0 %v620
    %737 = vmatpush.bf16.msra.mxu0 %v616
    %738 = vmatpush.bf16.msra.mxu0 %v612
    %739 = vmatpush.bf16.msra.mxu0 %v608
    %740 = vmatpush.bf16.msra.mxu0 %v604
    %741 = vmatpush.bf16.msra.mxu0 %v600
    %742 = vmatmul.bf16.gmra.mxu0 %v365
    %v743 = vpop.f32.mrf.mxu0
    %v744 = vadd.f32 %v731, %v743
    %v745 = vpop.f32.mrf.mxu0
    %746 = vdwg.mxu0
    %747 = vmatpush.bf16.msra.mxu0 %v597
    %748 = vmatpush.bf16.msra.mxu0 %v593
    %749 = vmatpush.bf16.msra.mxu0 %v589
    %750 = vmatpush.bf16.msra.mxu0 %v585
    %751 = vmatpush.bf16.msra.mxu0 %v581
    %752 = vmatpush.bf16.msra.mxu0 %v577
    %753 = vmatpush.bf16.msra.mxu0 %v573
    %754 = vmatpush.bf16.msra.mxu0 %v569
    %755 = vmatmul.bf16.gmra.mxu0 %v364
    %v756 = vpop.f32.mrf.mxu0
    %v757 = vadd.f32 %v369, %v756
    %v758 = vpop.f32.mrf.mxu0
    %759 = vdwg.mxu0
    %760 = vmatpush.bf16.msra.mxu0 %v629
    %761 = vmatpush.bf16.msra.mxu0 %v625
    %762 = vmatpush.bf16.msra.mxu0 %v621
    %763 = vmatpush.bf16.msra.mxu0 %v617
    %764 = vmatpush.bf16.msra.mxu0 %v613
    %765 = vmatpush.bf16.msra.mxu0 %v609
    %766 = vmatpush.bf16.msra.mxu0 %v605
    %767 = vmatpush.bf16.msra.mxu0 %v601
    %768 = vmatmul.bf16.gmra.mxu0 %v365
    %v769 = vpop.f32.mrf.mxu0
    %v770 = vadd.f32 %v757, %v769
    %v771 = vpop.f32.mrf.mxu0
    %772 = vdwg.mxu0
    %773 = vmatpush.bf16.msra.mxu0 %v598
    %774 = vmatpush.bf16.msra.mxu0 %v594
    %775 = vmatpush.bf16.msra.mxu0 %v590
    %776 = vmatpush.bf16.msra.mxu0 %v586
    %777 = vmatpush.bf16.msra.mxu0 %v582
    %778 = vmatpush.bf16.msra.mxu0 %v578
    %779 = vmatpush.bf16.msra.mxu0 %v574
    %780 = vmatpush.bf16.msra.mxu0 %v570
    %781 = vmatmul.bf16.gmra.mxu0 %v364
    %v782 = vpop.f32.mrf.mxu0
    %v783 = vadd.f32 %v370, %v782
    %v784 = vpop.f32.mrf.mxu0
    %785 = vdwg.mxu0
    %786 = vmatpush.bf16.msra.mxu0 %v630
    %787 = vmatpush.bf16.msra.mxu0 %v626
    %788 = vmatpush.bf16.msra.mxu0 %v622
    %789 = vmatpush.bf16.msra.mxu0 %v618
    %790 = vmatpush.bf16.msra.mxu0 %v614
    %791 = vmatpush.bf16.msra.mxu0 %v610
    %792 = vmatpush.bf16.msra.mxu0 %v606
    %793 = vmatpush.bf16.msra.mxu0 %v602
    %794 = vmatmul.bf16.gmra.mxu0 %v365
    %v795 = vpop.f32.mrf.mxu0
    %v796 = vadd.f32 %v783, %v795
    %v797 = vpop.f32.mrf.mxu0
    %798 = vdwg.mxu0
    %v799 = vmax.f32 %v718, 0.0
    %v800 = vmax.f32 %v744, 0.0
    %v801 = vmax.f32 %v770, 0.0
    %v802 = vmax.f32 %v796, 0.0
    %v803 = vpack.c.bf16 %v799, %v799
    %v804 = vpack.c.bf16 %v800, %v800
    %v805 = vpack.c.bf16 %v801, %v801
    %v806 = vpack.c.bf16 %v802, %v802
    %v808 = vperm.slane %v272, 0
    %v809 = vperm.slane %v272, 1
    %v876 = vunpack.c.l.b16 %v208
    %v877 = vunpack.c.h.b16 %v208
    %v878 = vunpack.c.l.b16 %v209
    %v879 = vunpack.c.h.b16 %v209
    %v880 = vunpack.c.l.b16 %v210
    %v881 = vunpack.c.h.b16 %v210
    %v882 = vunpack.c.l.b16 %v211
    %v883 = vunpack.c.h.b16 %v211
    %v884 = vunpack.c.l.b16 %v212
    %v885 = vunpack.c.h.b16 %v212
    %v886 = vunpack.c.l.b16 %v213
    %v887 = vunpack.c.h.b16 %v213
    %v888 = vunpack.c.l.b16 %v214
    %v889 = vunpack.c.h.b16 %v214
    %v890 = vunpack.c.l.b16 %v215
    %v891 = vunpack.c.h.b16 %v215
    %v892 = vunpack.c.l.b16 %v216
    %v893 = vunpack.c.h.b16 %v216
    %v894 = vunpack.c.l.b16 %v217
    %v895 = vunpack.c.h.b16 %v217
    %v896 = vunpack.c.l.b16 %v218
    %v897 = vunpack.c.h.b16 %v218
    %v898 = vunpack.c.l.b16 %v219
    %v899 = vunpack.c.h.b16 %v219
    %v900 = vunpack.c.l.b16 %v220
    %v901 = vunpack.c.h.b16 %v220
    %v902 = vunpack.c.l.b16 %v221
    %v903 = vunpack.c.h.b16 %v221
    %v904 = vunpack.c.l.b16 %v222
    %v905 = vunpack.c.h.b16 %v222
    %v906 = vunpack.c.l.b16 %v223
    %v907 = vunpack.c.h.b16 %v223
    %v908 = vunpack.c.l.b16 %v224
    %v909 = vunpack.c.h.b16 %v224
    %v910 = vunpack.c.l.b16 %v225
    %v911 = vunpack.c.h.b16 %v225
    %v912 = vunpack.c.l.b16 %v226
    %v913 = vunpack.c.h.b16 %v226
    %v914 = vunpack.c.l.b16 %v227
    %v915 = vunpack.c.h.b16 %v227
    %v916 = vunpack.c.l.b16 %v228
    %v917 = vunpack.c.h.b16 %v228
    %v918 = vunpack.c.l.b16 %v229
    %v919 = vunpack.c.h.b16 %v229
    %v920 = vunpack.c.l.b16 %v230
    %v921 = vunpack.c.h.b16 %v230
    %v922 = vunpack.c.l.b16 %v231
    %v923 = vunpack.c.h.b16 %v231
    %v924 = vunpack.c.l.b16 %v232
    %v925 = vunpack.c.h.b16 %v232
    %v926 = vunpack.c.l.b16 %v233
    %v927 = vunpack.c.h.b16 %v233
    %v928 = vunpack.c.l.b16 %v234
    %v929 = vunpack.c.h.b16 %v234
    %v930 = vunpack.c.l.b16 %v235
    %v931 = vunpack.c.h.b16 %v235
    %v932 = vunpack.c.l.b16 %v236
    %v933 = vunpack.c.h.b16 %v236
    %v934 = vunpack.c.l.b16 %v237
    %v935 = vunpack.c.h.b16 %v237
    %v936 = vunpack.c.l.b16 %v238
    %v937 = vunpack.c.h.b16 %v238
    %v938 = vunpack.c.l.b16 %v239
    %v939 = vunpack.c.h.b16 %v239
    %v940 = vunpack.c.l.b16 %v240
    %v941 = vunpack.c.h.b16 %v240
    %v942 = vunpack.c.l.b16 %v241
    %v943 = vunpack.c.h.b16 %v241
    %v944 = vunpack.c.l.b16 %v242
    %v945 = vunpack.c.h.b16 %v242
    %v946 = vunpack.c.l.b16 %v243
    %v947 = vunpack.c.h.b16 %v243
    %v948 = vunpack.c.l.b16 %v244
    %v949 = vunpack.c.h.b16 %v244
    %v950 = vunpack.c.l.b16 %v245
    %v951 = vunpack.c.h.b16 %v245
    %v952 = vunpack.c.l.b16 %v246
    %v953 = vunpack.c.h.b16 %v246
    %v954 = vunpack.c.l.b16 %v247
    %v955 = vunpack.c.h.b16 %v247
    %v956 = vunpack.c.l.b16 %v248
    %v957 = vunpack.c.h.b16 %v248
    %v958 = vunpack.c.l.b16 %v249
    %v959 = vunpack.c.h.b16 %v249
    %v960 = vunpack.c.l.b16 %v250
    %v961 = vunpack.c.h.b16 %v250
    %v962 = vunpack.c.l.b16 %v251
    %v963 = vunpack.c.h.b16 %v251
    %v964 = vunpack.c.l.b16 %v252
    %v965 = vunpack.c.h.b16 %v252
    %v966 = vunpack.c.l.b16 %v253
    %v967 = vunpack.c.h.b16 %v253
    %v968 = vunpack.c.l.b16 %v254
    %v969 = vunpack.c.h.b16 %v254
    %v970 = vunpack.c.l.b16 %v255
    %v971 = vunpack.c.h.b16 %v255
    %v972 = vunpack.c.l.b16 %v256
    %v973 = vunpack.c.h.b16 %v256
    %v974 = vunpack.c.l.b16 %v257
    %v975 = vunpack.c.h.b16 %v257
    %v976 = vunpack.c.l.b16 %v258
    %v977 = vunpack.c.h.b16 %v258
    %v978 = vunpack.c.l.b16 %v259
    %v979 = vunpack.c.h.b16 %v259
    %v980 = vunpack.c.l.b16 %v260
    %v981 = vunpack.c.h.b16 %v260
    %v982 = vunpack.c.l.b16 %v261
    %v983 = vunpack.c.h.b16 %v261
    %v984 = vunpack.c.l.b16 %v262
    %v985 = vunpack.c.h.b16 %v262
    %v986 = vunpack.c.l.b16 %v263
    %v987 = vunpack.c.h.b16 %v263
    %v988 = vunpack.c.l.b16 %v264
    %v989 = vunpack.c.h.b16 %v264
    %v990 = vunpack.c.l.b16 %v265
    %v991 = vunpack.c.h.b16 %v265
    %v992 = vunpack.c.l.b16 %v266
    %v993 = vunpack.c.h.b16 %v266
    %v994 = vunpack.c.l.b16 %v267
    %v995 = vunpack.c.h.b16 %v267
    %v996 = vunpack.c.l.b16 %v268
    %v997 = vunpack.c.h.b16 %v268
    %v998 = vunpack.c.l.b16 %v269
    %v999 = vunpack.c.h.b16 %v269
    %v1000 = vunpack.c.l.b16 %v270
    %v1001 = vunpack.c.h.b16 %v270
    %v1002 = vunpack.c.l.b16 %v271
    %v1003 = vunpack.c.h.b16 %v271
    %v1004 = vpack.c.b16 %v878, %v876
    %v1005 = vpack.c.b16 %v879, %v877
    %v1006 = vpack.c.b16 %v882, %v880
    %v1007 = vpack.c.b16 %v883, %v881
    %v1008 = vpack.c.b16 %v886, %v884
    %v1009 = vpack.c.b16 %v887, %v885
    %v1010 = vpack.c.b16 %v890, %v888
    %v1011 = vpack.c.b16 %v891, %v889
    %v1012 = vpack.c.b16 %v894, %v892
    %v1013 = vpack.c.b16 %v895, %v893
    %v1014 = vpack.c.b16 %v898, %v896
    %v1015 = vpack.c.b16 %v899, %v897
    %v1016 = vpack.c.b16 %v902, %v900
    %v1017 = vpack.c.b16 %v903, %v901
    %v1018 = vpack.c.b16 %v906, %v904
    %v1019 = vpack.c.b16 %v907, %v905
    %v1020 = vpack.c.b16 %v910, %v908
    %v1021 = vpack.c.b16 %v911, %v909
    %v1022 = vpack.c.b16 %v914, %v912
    %v1023 = vpack.c.b16 %v915, %v913
    %v1024 = vpack.c.b16 %v918, %v916
    %v1025 = vpack.c.b16 %v919, %v917
    %v1026 = vpack.c.b16 %v922, %v920
    %v1027 = vpack.c.b16 %v923, %v921
    %v1028 = vpack.c.b16 %v926, %v924
    %v1029 = vpack.c.b16 %v927, %v925
    %v1030 = vpack.c.b16 %v930, %v928
    %v1031 = vpack.c.b16 %v931, %v929
    %v1032 = vpack.c.b16 %v934, %v932
    %v1033 = vpack.c.b16 %v935, %v933
    %v1034 = vpack.c.b16 %v938, %v936
    %v1035 = vpack.c.b16 %v939, %v937
    %v1036 = vpack.c.b16 %v942, %v940
    %v1037 = vpack.c.b16 %v943, %v941
    %v1038 = vpack.c.b16 %v946, %v944
    %v1039 = vpack.c.b16 %v947, %v945
    %v1040 = vpack.c.b16 %v950, %v948
    %v1041 = vpack.c.b16 %v951, %v949
    %v1042 = vpack.c.b16 %v954, %v952
    %v1043 = vpack.c.b16 %v955, %v953
    %v1044 = vpack.c.b16 %v958, %v956
    %v1045 = vpack.c.b16 %v959, %v957
    %v1046 = vpack.c.b16 %v962, %v960
    %v1047 = vpack.c.b16 %v963, %v961
    %v1048 = vpack.c.b16 %v966, %v964
    %v1049 = vpack.c.b16 %v967, %v965
    %v1050 = vpack.c.b16 %v970, %v968
    %v1051 = vpack.c.b16 %v971, %v969
    %v1052 = vpack.c.b16 %v974, %v972
    %v1053 = vpack.c.b16 %v975, %v973
    %v1054 = vpack.c.b16 %v978, %v976
    %v1055 = vpack.c.b16 %v979, %v977
    %v1056 = vpack.c.b16 %v982, %v980
    %v1057 = vpack.c.b16 %v983, %v981
    %v1058 = vpack.c.b16 %v986, %v984
    %v1059 = vpack.c.b16 %v987, %v985
    %v1060 = vpack.c.b16 %v990, %v988
    %v1061 = vpack.c.b16 %v991, %v989
    %v1062 = vpack.c.b16 %v994, %v992
    %v1063 = vpack.c.b16 %v995, %v993
    %v1064 = vpack.c.b16 %v998, %v996
    %v1065 = vpack.c.b16 %v999, %v997
    %v1066 = vpack.c.b16 %v1002, %v1000
    %v1067 = vpack.c.b16 %v1003, %v1001
    %1132 = vmatpush.bf16.msra.mxu0 %v1018
    %1133 = vmatpush.bf16.msra.mxu0 %v1016
    %1134 = vmatpush.bf16.msra.mxu0 %v1014
    %1135 = vmatpush.bf16.msra.mxu0 %v1012
    %1136 = vmatpush.bf16.msra.mxu0 %v1010
    %1137 = vmatpush.bf16.msra.mxu0 %v1008
    %1138 = vmatpush.bf16.msra.mxu0 %v1006
    %1139 = vmatpush.bf16.msra.mxu0 %v1004
    %1140 = vmatmul.bf16.gmra.mxu0 %v803
    %v1141 = vpop.f32.mrf.mxu0
    %v1142 = vadd.f32 %v808, %v1141
    %v1143 = vpop.f32.mrf.mxu0
    %1144 = vdwg.mxu0
    %1145 = vmatpush.bf16.msra.mxu0 %v1034
    %1146 = vmatpush.bf16.msra.mxu0 %v1032
    %1147 = vmatpush.bf16.msra.mxu0 %v1030
    %1148 = vmatpush.bf16.msra.mxu0 %v1028
    %1149 = vmatpush.bf16.msra.mxu0 %v1026
    %1150 = vmatpush.bf16.msra.mxu0 %v1024
    %1151 = vmatpush.bf16.msra.mxu0 %v1022
    %1152 = vmatpush.bf16.msra.mxu0 %v1020
    %1153 = vmatmul.bf16.gmra.mxu0 %v804
    %v1154 = vpop.f32.mrf.mxu0
    %v1155 = vadd.f32 %v1142, %v1154
    %v1156 = vpop.f32.mrf.mxu0
    %1157 = vdwg.mxu0
    %1158 = vmatpush.bf16.msra.mxu0 %v1050
    %1159 = vmatpush.bf16.msra.mxu0 %v1048
    %1160 = vmatpush.bf16.msra.mxu0 %v1046
    %1161 = vmatpush.bf16.msra.mxu0 %v1044
    %1162 = vmatpush.bf16.msra.mxu0 %v1042
    %1163 = vmatpush.bf16.msra.mxu0 %v1040
    %1164 = vmatpush.bf16.msra.mxu0 %v1038
    %1165 = vmatpush.bf16.msra.mxu0 %v1036
    %1166 = vmatmul.bf16.gmra.mxu0 %v805
    %v1167 = vpop.f32.mrf.mxu0
    %v1168 = vadd.f32 %v1155, %v1167
    %v1169 = vpop.f32.mrf.mxu0
    %1170 = vdwg.mxu0
    %1171 = vmatpush.bf16.msra.mxu0 %v1066
    %1172 = vmatpush.bf16.msra.mxu0 %v1064
    %1173 = vmatpush.bf16.msra.mxu0 %v1062
    %1174 = vmatpush.bf16.msra.mxu0 %v1060
    %1175 = vmatpush.bf16.msra.mxu0 %v1058
    %1176 = vmatpush.bf16.msra.mxu0 %v1056
    %1177 = vmatpush.bf16.msra.mxu0 %v1054
    %1178 = vmatpush.bf16.msra.mxu0 %v1052
    %1179 = vmatmul.bf16.gmra.mxu0 %v806
    %v1180 = vpop.f32.mrf.mxu0
    %v1181 = vadd.f32 %v1168, %v1180
    %v1182 = vpop.f32.mrf.mxu0
    %1183 = vdwg.mxu0
    %1184 = vmatpush.bf16.msra.mxu0 %v1019
    %1185 = vmatpush.bf16.msra.mxu0 %v1017
    %1186 = vmatpush.bf16.msra.mxu0 %v1015
    %1187 = vmatpush.bf16.msra.mxu0 %v1013
    %1188 = vmatpush.bf16.msra.mxu0 %v1011
    %1189 = vmatpush.bf16.msra.mxu0 %v1009
    %1190 = vmatpush.bf16.msra.mxu0 %v1007
    %1191 = vmatpush.bf16.msra.mxu0 %v1005
    %1192 = vmatmul.bf16.gmra.mxu0 %v803
    %v1193 = vpop.f32.mrf.mxu0
    %v1194 = vadd.f32 %v809, %v1193
    %v1195 = vpop.f32.mrf.mxu0
    %1196 = vdwg.mxu0
    %1197 = vmatpush.bf16.msra.mxu0 %v1035
    %1198 = vmatpush.bf16.msra.mxu0 %v1033
    %1199 = vmatpush.bf16.msra.mxu0 %v1031
    %1200 = vmatpush.bf16.msra.mxu0 %v1029
    %1201 = vmatpush.bf16.msra.mxu0 %v1027
    %1202 = vmatpush.bf16.msra.mxu0 %v1025
    %1203 = vmatpush.bf16.msra.mxu0 %v1023
    %1204 = vmatpush.bf16.msra.mxu0 %v1021
    %1205 = vmatmul.bf16.gmra.mxu0 %v804
    %v1206 = vpop.f32.mrf.mxu0
    %v1207 = vadd.f32 %v1194, %v1206
    %v1208 = vpop.f32.mrf.mxu0
    %1209 = vdwg.mxu0
    %1210 = vmatpush.bf16.msra.mxu0 %v1051
    %1211 = vmatpush.bf16.msra.mxu0 %v1049
    %1212 = vmatpush.bf16.msra.mxu0 %v1047
    %1213 = vmatpush.bf16.msra.mxu0 %v1045
    %1214 = vmatpush.bf16.msra.mxu0 %v1043
    %1215 = vmatpush.bf16.msra.mxu0 %v1041
    %1216 = vmatpush.bf16.msra.mxu0 %v1039
    %1217 = vmatpush.bf16.msra.mxu0 %v1037
    %1218 = vmatmul.bf16.gmra.mxu0 %v805
    %v1219 = vpop.f32.mrf.mxu0
    %v1220 = vadd.f32 %v1207, %v1219
    %v1221 = vpop.f32.mrf.mxu0
    %1222 = vdwg.mxu0
    %1223 = vmatpush.bf16.msra.mxu0 %v1067
    %1224 = vmatpush.bf16.msra.mxu0 %v1065
    %1225 = vmatpush.bf16.msra.mxu0 %v1063
    %1226 = vmatpush.bf16.msra.mxu0 %v1061
    %1227 = vmatpush.bf16.msra.mxu0 %v1059
    %1228 = vmatpush.bf16.msra.mxu0 %v1057
    %1229 = vmatpush.bf16.msra.mxu0 %v1055
    %1230 = vmatpush.bf16.msra.mxu0 %v1053
    %1231 = vmatmul.bf16.gmra.mxu0 %v806
    %v1232 = vpop.f32.mrf.mxu0
    %v1233 = vadd.f32 %v1220, %v1232
    %v1234 = vpop.f32.mrf.mxu0
    %1235 = vdwg.mxu0
    %v1236 = vmax.f32 %v1181, 0.0
    %v1237 = vmax.f32 %v1233, 0.0
    %v1238 = vpack.c.bf16 %v1236, %v1236
    %v1239 = vpack.c.bf16 %v1237, %v1237
    %v1241 = vperm.slane %v305, 0
    %v1275 = vunpack.c.l.b16 %v273
    %v1276 = vunpack.c.l.b16 %v274
    %v1277 = vunpack.c.l.b16 %v275
    %v1278 = vunpack.c.l.b16 %v276
    %v1279 = vunpack.c.l.b16 %v277
    %v1280 = vunpack.c.l.b16 %v278
    %v1281 = vunpack.c.l.b16 %v279
    %v1282 = vunpack.c.l.b16 %v280
    %v1283 = vunpack.c.l.b16 %v281
    %v1284 = vunpack.c.l.b16 %v282
    %v1285 = vunpack.c.l.b16 %v283
    %v1286 = vunpack.c.l.b16 %v284
    %v1287 = vunpack.c.l.b16 %v285
    %v1288 = vunpack.c.l.b16 %v286
    %v1289 = vunpack.c.l.b16 %v287
    %v1290 = vunpack.c.l.b16 %v288
    %v1291 = vunpack.c.l.b16 %v289
    %v1292 = vunpack.c.l.b16 %v290
    %v1293 = vunpack.c.l.b16 %v291
    %v1294 = vunpack.c.l.b16 %v292
    %v1295 = vunpack.c.l.b16 %v293
    %v1296 = vunpack.c.l.b16 %v294
    %v1297 = vunpack.c.l.b16 %v295
    %v1298 = vunpack.c.l.b16 %v296
    %v1299 = vunpack.c.l.b16 %v297
    %v1300 = vunpack.c.l.b16 %v298
    %v1301 = vunpack.c.l.b16 %v299
    %v1302 = vunpack.c.l.b16 %v300
    %v1303 = vunpack.c.l.b16 %v301
    %v1304 = vunpack.c.l.b16 %v302
    %v1305 = vunpack.c.l.b16 %v303
    %v1306 = vunpack.c.l.b16 %v304
    %v1307 = vpack.c.b16 %v1276, %v1275
    %v1308 = vpack.c.b16 %v1278, %v1277
    %v1309 = vpack.c.b16 %v1280, %v1279
    %v1310 = vpack.c.b16 %v1282, %v1281
    %v1311 = vpack.c.b16 %v1284, %v1283
    %v1312 = vpack.c.b16 %v1286, %v1285
    %v1313 = vpack.c.b16 %v1288, %v1287
    %v1314 = vpack.c.b16 %v1290, %v1289
    %v1315 = vpack.c.b16 %v1292, %v1291
    %v1316 = vpack.c.b16 %v1294, %v1293
    %v1317 = vpack.c.b16 %v1296, %v1295
    %v1318 = vpack.c.b16 %v1298, %v1297
    %v1319 = vpack.c.b16 %v1300, %v1299
    %v1320 = vpack.c.b16 %v1302, %v1301
    %v1321 = vpack.c.b16 %v1304, %v1303
    %v1322 = vpack.c.b16 %v1306, %v1305
    %1339 = vmatpush.bf16.msra.mxu0 %v1314
    %1340 = vmatpush.bf16.msra.mxu0 %v1313
    %1341 = vmatpush.bf16.msra.mxu0 %v1312
    %1342 = vmatpush.bf16.msra.mxu0 %v1311
    %1343 = vmatpush.bf16.msra.mxu0 %v1310
    %1344 = vmatpush.bf16.msra.mxu0 %v1309
    %1345 = vmatpush.bf16.msra.mxu0 %v1308
    %1346 = vmatpush.bf16.msra.mxu0 %v1307
    %1347 = vmatmul.bf16.gmra.mxu0 %v1238
    %v1348 = vpop.f32.mrf.mxu0
    %v1349 = vadd.f32 %v1241, %v1348
    %v1350 = vpop.f32.mrf.mxu0
    %1351 = vdwg.mxu0
    %1352 = vmatpush.bf16.msra.mxu0 %v1322
    %1353 = vmatpush.bf16.msra.mxu0 %v1321
    %1354 = vmatpush.bf16.msra.mxu0 %v1320
    %1355 = vmatpush.bf16.msra.mxu0 %v1319
    %1356 = vmatpush.bf16.msra.mxu0 %v1318
    %1357 = vmatpush.bf16.msra.mxu0 %v1317
    %1358 = vmatpush.bf16.msra.mxu0 %v1316
    %1359 = vmatpush.bf16.msra.mxu0 %v1315
    %1360 = vmatmul.bf16.gmra.mxu0 %v1239
    %v1361 = vpop.f32.mrf.mxu0
    %v1362 = vadd.f32 %v1349, %v1361
    %v1363 = vpop.f32.mrf.mxu0
    %1364 = vdwg.mxu0
    %1365 = vst [vmem:[#allocation14] sm:$0xff] %v1362
    // Predicated region
    $region66: #{tpu_custom_call.1} parent=1 // pred_check
      _
    $region67: #{tpu_custom_call.1} parent=1 // pred_check_branch
      %1367 = sbr.rel (0) target = $region69
    $region68: #{tpu_custom_call.1} parent=1 // pred_region
      %1369 = vsyncadd [#allocation4], 0
      %s1371 = sshll.u32 [#allocation14], 4
      %s1372 = int_to_ptr.vmem [resolvable:$true] %s1371
      %s1373 = sshll.u32 %s9, 4
      %s1374 = int_to_ptr.hbm [resolvable:$true] %s1373
      %1376 = dma.vmem_to_hbm [thread:$0]  %s1372, 128, %s1374, [#allocation4]
    $region69: #{tpu_custom_call.1} parent=1 // pred_fallthru
      _
    // Predicated region
    $region70: #{tpu_custom_call.1} parent=1 // pred_check
      _
    $region71: #{tpu_custom_call.1} parent=1 // pred_check_branch
      %1378 = sbr.rel (0) target = $region73
    $region72: #{tpu_custom_call.1} parent=1 // pred_region
      %1380 = dma.done [#allocation4], 128
    $region73: #{tpu_custom_call.1} parent=1 // pred_fallthru
      _
    %1381 = vsyncpa [#allocation3], 1
    %1382 = vsyncpa [#allocation6], 1
    %1383 = vsyncpa [#allocation9], 1
    %1384 = vsyncpa [#allocation12], 1
    %1385 = vsyncpa [#allocation4], 1

</llo_original>
